<compile_context>
chip_gen: v7x
topology: tpu7x:2x2x1
jax: 0.10.0
libtpu: 0.0.40
codegen_flags: <defaults>
</compile_context>

<pallas_src>
import jax
import jax.numpy as jnp
from jax import lax
from jax.experimental import pallas as pl
from jax.experimental.pallas import tpu as pltpu


def _rmsnorm3d_kernel(eps, x_ref, w_ref, o_ref):
    # x_ref: (1, C, T) tile;  w_ref: (1, C, 1);  o_ref: (1, C, T)
    # f32-accumulated channel mean; no full-tile f32 temporary is kept live.
    m = jnp.mean(x_ref[...], axis=1, keepdims=True, dtype=jnp.float32)  # (1,1,T)
    scale = lax.rsqrt(m + eps)                                          # EUP slot
    w = w_ref[...].astype(jnp.float32)                                  # (1,C,1)
    # Second read of x fused into load -> mul -> downcast -> upcast*w -> store.
    n = (x_ref[...].astype(jnp.float32) * scale).astype(x_ref.dtype)    # .type_as(x)
    o_ref[...] = (n.astype(jnp.float32) * w).astype(o_ref.dtype)        # n * weight


def _round_down_128(n):
    return (n // 128) * 128


def _vmem_capacity_bytes():
    """Per-TensorCore VMEM capacity; conservative (v7x) default if query fails."""
    try:
        info = pltpu.get_tpu_info()
        cap = getattr(info, "vmem_capacity_bytes", None)
        if cap:
            return int(cap)
    except Exception:
        pass
    return 64 << 20  # assume the smallest (v7x per-TC) if unknown


def _choose_hw_tile(hw, c, in_itemsize, out_itemsize, vmem_budget_bytes,
                    target_tile_bytes, batch):
    """Lane tile T: multiple of 128 (or the full hw), bytes-based, VMEM-capped."""
    if hw <= 128:
        return hw  # full-extent block (always legal), trivially small
    # Channels pad to the sublane pack: 8 for f32, 16 for bf16, 32 for int8.
    pack = max(8, 32 // max(in_itemsize, 1))
    c_pad = ((c + pack - 1) // pack) * pack
    # Target ~target_tile_bytes of HBM input bytes per grid step.
    t_target = target_tile_bytes // (c_pad * in_itemsize)
    # VMEM: 2x input + 2x output double-buffers + ~8 B/elem f32 working set.
    per_elem = 2 * in_itemsize + 2 * out_itemsize + 8
    t_vmem = vmem_budget_bytes // (c_pad * per_elem)
    t = max(128, _round_down_128(min(t_target, t_vmem)))
    if t >= hw:
        if batch == 1 and hw >= 256:
            # Keep >= 2 grid steps so both v7x TensorCores get work.
            return max(128, _round_down_128(hw // 2))
        return hw  # whole spatial extent in one budget-respecting block
    return t


def rmsnorm3d(x, weight, eps=1e-6, target_tile_bytes=4 << 20):
    """x: (B, C, H, W); weight: (1, C, 1, 1). Matches PyTorch RMSNorm3D.forward."""
    B, C, H, W = x.shape
    HW = H * W
    out_dtype = jnp.promote_types(x.dtype, weight.dtype)  # PyTorch: n * weight

    # Free, contiguous reshapes -> lane-dense last dim.
    x2 = x.reshape(B, C, HW)
    w2 = weight.reshape(1, C, 1)

    in_item = jnp.dtype(x.dtype).itemsize
    out_item = jnp.dtype(out_dtype).itemsize
    w_item = jnp.dtype(weight.dtype).itemsize

    # Per-generation VMEM sizing: budget ~50% of capacity for tile sizing,
    # raise the scoped limit to ~75% (<= 96 MiB) so the pipeliner can use it.
    cap = _vmem_capacity_bytes()
    vmem_budget = cap // 2
    vmem_limit = min((cap * 3) // 4, 96 << 20)

    T = _choose_hw_tile(HW, C, in_item, out_item, vmem_budget,
                        target_tile_bytes, B)
    num_t = pl.cdiv(HW, T)  # ragged last tile is masked on store

    kernel = lambda x_ref, w_ref, o_ref: _rmsnorm3d_kernel(eps, x_ref, w_ref, o_ref)

    cost = pl.CostEstimate(
        flops=3 * B * C * HW,                                   # mean + scale + weight mul
        transcendentals=B * HW,                                 # one rsqrt per (b, h, w)
        bytes_accessed=B * C * HW * (in_item + out_item) + C * w_item,
    )

    out = pl.pallas_call(
        kernel,
        out_shape=jax.ShapeDtypeStruct((B, C, HW), out_dtype),
        grid_spec=pltpu.PrefetchScalarGridSpec(
            num_scalar_prefetch=0,
            grid=(B, num_t),
            in_specs=[
                pl.BlockSpec((1, C, T), lambda b, t: (b, 0, t)),
                pl.BlockSpec((1, C, 1), lambda b, t: (0, 0, 0)),  # fetched once
            ],
            out_specs=pl.BlockSpec((1, C, T), lambda b, t: (b, 0, t)),
        ),
        compiler_params=pltpu.CompilerParams(
            dimension_semantics=("parallel", "parallel"),
            vmem_limit_bytes=vmem_limit,
        ),
        cost_estimate=cost,
    )(x2, w2)

    return out.reshape(B, C, H, W)


def rmsnorm3d_ref(x, weight, eps=1e-6):
    xf = x.astype(jnp.float32)
    m = jnp.mean(xf, axis=1, keepdims=True)
    n = (xf * lax.rsqrt(m + eps)).astype(x.dtype)   # .type_as(x)
    return n * weight                               # promotes like PyTorch


if __name__ == "__main__":
    key = jax.random.PRNGKey(0)
    B, C, H, W = 2, 4, 16, 16
    # Keep values positive so rsqrt(mean(x)+eps) is well defined (matches the
    # module's literal semantics x.pow(1)).
    x = jax.random.uniform(key, (B, C, H, W), dtype=jnp.float32,
                           minval=0.1, maxval=2.0)
    # Deterministic parameter init: nn.Parameter(torch.ones(1, dim, 1, 1)).
    weight = jnp.ones((1, C, 1, 1), dtype=jnp.float32)

    out = rmsnorm3d(x, weight)
    out = jax.block_until_ready(out)

    ref = rmsnorm3d_ref(x, weight)
    assert out.shape == ref.shape and out.dtype == ref.dtype
    assert jnp.allclose(out, ref, atol=1e-5, rtol=1e-5), "mismatch vs reference"

    print("KERNEL_OK")
</pallas_src>

<mosaic_0001>
module attributes {stable_mosaic.version = 11 : i64} {
  func.func @_lambda_(%arg0: i32, %arg1: i32, %arg2: memref<1x4x256xf32, #tpu.memory_space<vmem>>, %arg3: memref<1x4x1xf32, #tpu.memory_space<vmem>>, %arg4: memref<1x4x256xf32, #tpu.memory_space<vmem>>) attributes {dimension_semantics = [#tpu.dimension_semantics<parallel>, #tpu.dimension_semantics<parallel>], iteration_bounds = array<i64: 2, 1>, scalar_prefetch = 0 : i64, scratch_operands = 0 : i64, tpu.core_type = #tpu.core_type<tc>, window_params = [{transform_indices = @transform_0, window_bounds = array<i64: 1, 4, 256>}, {pipeline_mode = #tpu.pipeline_mode<synchronous>, transform_indices = @transform_1, window_bounds = array<i64: 1, 4, 1>}, {transform_indices = @transform_2, window_bounds = array<i64: 1, 4, 256>}]} {
    %c0 = arith.constant 0 : index
    %c0_0 = arith.constant 0 : index
    %c0_1 = arith.constant 0 : index
    %0 = vector.load %arg2[%c0, %c0_0, %c0_1] : memref<1x4x256xf32, #tpu.memory_space<vmem>>, vector<1x4x256xf32>
    %cst = arith.constant dense<0.000000e+00> : vector<1x256xf32>
    %1 = vector.multi_reduction <add>, %0, %cst [1] : vector<1x4x256xf32> to vector<1x256xf32>
    %2 = vector.shape_cast %1 : vector<1x256xf32> to vector<1x1x256xf32>
    %cst_2 = arith.constant 4.000000e+00 : f32
    %3 = vector.broadcast %cst_2 : f32 to vector<1x1x256xf32>
    %4 = arith.divf %2, %3 : vector<1x1x256xf32>
    %cst_3 = arith.constant 9.99999997E-7 : f32
    %5 = vector.broadcast %cst_3 : f32 to vector<1x1x256xf32>
    %6 = arith.addf %4, %5 : vector<1x1x256xf32>
    %7 = math.rsqrt %6 : vector<1x1x256xf32>
    %c0_4 = arith.constant 0 : index
    %c0_5 = arith.constant 0 : index
    %c0_6 = arith.constant 0 : index
    %8 = vector.load %arg3[%c0_4, %c0_5, %c0_6] : memref<1x4x1xf32, #tpu.memory_space<vmem>>, vector<1x4x1xf32>
    %c0_7 = arith.constant 0 : index
    %c0_8 = arith.constant 0 : index
    %c0_9 = arith.constant 0 : index
    %9 = vector.load %arg2[%c0_7, %c0_8, %c0_9] : memref<1x4x256xf32, #tpu.memory_space<vmem>>, vector<1x4x256xf32>
    %10 = vector.broadcast %7 : vector<1x1x256xf32> to vector<1x4x256xf32>
    %11 = arith.mulf %9, %10 : vector<1x4x256xf32>
    %12 = vector.broadcast %8 : vector<1x4x1xf32> to vector<1x4x256xf32>
    %13 = arith.mulf %11, %12 : vector<1x4x256xf32>
    %c0_10 = arith.constant 0 : index
    %c0_11 = arith.constant 0 : index
    %c0_12 = arith.constant 0 : index
    %14 = vector.load %arg4[%c0_10, %c0_11, %c0_12] : memref<1x4x256xf32, #tpu.memory_space<vmem>>, vector<1x4x256xf32>
    tpu.vector_store %arg4[%c0_10, %c0_11, %c0_12], %13 {strides = array<i32>} : memref<1x4x256xf32, #tpu.memory_space<vmem>>, vector<1x4x256xf32>,
    return
  }
  func.func @transform_0(%arg0: i32, %arg1: i32) -> (i32, i32, i32) {
    %c0_i32 = arith.constant 0 : i32
    %c0_i32_0 = arith.constant 0 : i32
    return %arg0, %c0_i32, %arg1 : i32, i32, i32
  }
  func.func @transform_1(%arg0: i32, %arg1: i32) -> (i32, i32, i32) {
    %c0_i32 = arith.constant 0 : i32
    %c0_i32_0 = arith.constant 0 : i32
    %c0_i32_1 = arith.constant 0 : i32
    %c0_i32_2 = arith.constant 0 : i32
    return %c0_i32, %c0_i32_0, %c0_i32_1 : i32, i32, i32
  }
  func.func @transform_2(%arg0: i32, %arg1: i32) -> (i32, i32, i32) {
    %c0_i32 = arith.constant 0 : i32
    %c0_i32_0 = arith.constant 0 : i32
    return %arg0, %c0_i32, %arg1 : i32, i32, i32
  }
}

</mosaic_0001>

<llo_original>
// kernel: tpu_custom_call.1
$region0: #{tpu_custom_call.1}
  #allocation0 [shape = 'u32[]', space=smem, size = 0x4, offset = 0x4, fixed_abs, tag = 'smem constant byte address 0x4 - core index']
  #allocation1 [shape = 'u32[144,128]{1,0:T(1,128)}', space=vmem, size = 0x12000, scoped, tag = 'internal scratch']
  %s0 = inlined_call_operand.hbm [shape: f32[2,4,256], index: 0, kind: input, shape index: {}]
  %s1 = inlined_call_operand.vmem [shape: f32[1,4,1], index: 1, kind: input, shape index: {}]
  %s2 = inlined_call_operand.hbm [shape: f32[2,4,256], index: 2, kind: output, shape index: {}]
  %s3 = sld [smem:[#allocation0]]
  $region45: #{tpu_custom_call.1} parent=0
    _
  %s5 = ssub.s32 1, %s3
  %s6 = scalar_select 0, %s5, %s3
  $region1: #{tpu_custom_call.1} parent=0
    #allocation2 [shape = 'u8[8192]{0}', space=vmem, size = 0x2000, scoped, tag = 'input window, operand 0']
    #allocation3 [shape = 's32[2]{0}', space=sflag, size = 0x8, scoped, tag = 'scoped memory for tpu_custom_call.1']
    #allocation4 [shape = 's32[2]{0}', space=sflag, size = 0x8, scoped, tag = 'scoped memory for tpu_custom_call.1']
    #allocation5 [shape = 'u8[8192]{0}', space=vmem, size = 0x2000, scoped, tag = 'output window, operand 0']
    %7 = vsyncpa [#allocation3], 0
    %s8 = scalar_lea.sflag [#allocation3], 1
    %9 = vsyncpa %s8, 0
    %10 = vsyncpa [#allocation4], 0
    %s11 = scalar_lea.sflag [#allocation4], 1
    %12 = vsyncpa %s11, 0
    loop: start=0, step=1, limit=4
    $region2: #{tpu_custom_call.1} parent=1 // loop_pre_header
      _
    $region3: #{tpu_custom_call.1} parent=1 // loop_header
      %s14 = sphi 0, %s18
      %p15 = scmp.ge.s32.totalorder %s14, 4
      %s21 = sphi 0, %s33
      %s22 = sphi 0, %s29
      %s23 = sphi 0, %s21
      %s24 = sphi 0, %s22
      %s25 = sphi 0, %s23
      %s26 = sphi 0, %s24
      %s38 = sphi 0, %s40
      %s41 = sphi 0, %s38
      %s42 = sphi 0, %s41
      %s58 = sphi 0, %s42
      %s62 = sphi 0, %s62
      %s64 = sphi 0, %s62
      %s65 = sphi 0, %s64
      %s79 = sphi 0, %s65
      %s87 = sphi 0, %s89
      %s90 = sphi 0, %s87
      %s91 = sphi 0, %s90
      %s107 = sphi 0, %s91
    $region4: #{tpu_custom_call.1} parent=1 // loop_header_branch
      %17 = sbr.rel (%p15) target = $region8
    $region5: #{tpu_custom_call.1} parent=1 // loop_body
      %s19 = ssub.s32 %s14, 1
      %s20 = ssub.s32 %s14, 2
      %s27 = sadd.s32 1, %s22
      %p28 = scmp.ge.s32.totalorder %s27, 1
      %s29 = scalar_select %p28, 0, %s27
      %s30 = sadd.s32 1, %s21
      %s31 = scalar_select %p28, %s30, %s21
      %p32 = scmp.ge.s32.totalorder %s31, 2
      %s33 = scalar_select %p32, 0, %s31
      %s34 = ssub.s32 %s21, %s33
      %s35 = ssub.s32 %s22, %s29
      %s36 = sor.u32 %s34, %s35
      %p37 = scmp.eq.s32.totalorder %s36, 0
      %s39 = sadd.s32 %s38, 1
      %s40 = scalar_select %p37, %s38, %s39
      %p43 = pneg %p37
      %p44 = scmp.eq.s32.totalorder %s14, 1
      %p45 = por %p43, %p44
      %p46 = scmp.ne.s32.totalorder %s38, %s41
      %p47 = scmp.eq.s32.totalorder %s14, 0
      %p48 = por %p46, %p47
      %p49 = scmp.ne.s32.totalorder %s38, %s41
      %p50 = scmp.eq.s32.totalorder %s19, 1
      %p51 = por %p49, %p50
      %p52 = scmp.ne.s32.totalorder %s41, %s42
      %p53 = scmp.eq.s32.totalorder %s19, 0
      %p54 = por %p52, %p53
      %p55 = scmp.ne.s32.totalorder %s41, %s42
      %p56 = scmp.eq.s32.totalorder %s20, 1
      %p57 = por %p55, %p56
      %p59 = scmp.ne.s32.totalorder %s42, %s58
      %p60 = scmp.eq.s32.totalorder %s20, 0
      %p61 = por %p59, %p60
      %s63 = sadd.s32 %s62, 1
      %p66 = scmp.eq.s32.totalorder %s14, 1
      %p67 = scmp.ne.s32.totalorder %s62, %s64
      %p68 = scmp.eq.s32.totalorder %s14, 0
      %p69 = por %p67, %p68
      %p70 = scmp.ne.s32.totalorder %s62, %s64
      %p71 = scmp.eq.s32.totalorder %s19, 1
      %p72 = por %p70, %p71
      %p73 = scmp.ne.s32.totalorder %s64, %s65
      %p74 = scmp.eq.s32.totalorder %s19, 0
      %p75 = por %p73, %p74
      %p76 = scmp.ne.s32.totalorder %s64, %s65
      %p77 = scmp.eq.s32.totalorder %s20, 1
      %p78 = por %p76, %p77
      %p80 = scmp.ne.s32.totalorder %s65, %s79
      %p81 = scmp.eq.s32.totalorder %s20, 0
      %p82 = por %p80, %p81
      %s83 = ssub.s32 %s21, %s33
      %s84 = ssub.s32 %s22, %s29
      %s85 = sor.u32 %s83, %s84
      %p86 = scmp.eq.s32.totalorder %s85, 0
      %s88 = sadd.s32 %s87, 1
      %s89 = scalar_select %p86, %s87, %s88
      %p92 = pneg %p86
      %p93 = scmp.eq.s32.totalorder %s14, 1
      %p94 = por %p92, %p93
      %p95 = scmp.ne.s32.totalorder %s87, %s90
      %p96 = scmp.eq.s32.totalorder %s14, 0
      %p97 = por %p95, %p96
      %p98 = scmp.ne.s32.totalorder %s87, %s90
      %p99 = scmp.eq.s32.totalorder %s19, 1
      %p100 = por %p98, %p99
      %p101 = scmp.ne.s32.totalorder %s90, %s91
      %p102 = scmp.eq.s32.totalorder %s19, 0
      %p103 = por %p101, %p102
      %p104 = scmp.ne.s32.totalorder %s90, %s91
      %p105 = scmp.eq.s32.totalorder %s20, 1
      %p106 = por %p104, %p105
      %p108 = scmp.ne.s32.totalorder %s91, %s107
      %p109 = scmp.eq.s32.totalorder %s20, 0
      %p110 = por %p108, %p109
      %p111 = scmp.le.s32.totalorder 1, %s14
      %p112 = scmp.lt.s32.totalorder %s14, 3
      %p113 = pnand %p111, %p112
      %p114 = pneg %p113
      // Predicated region
      $region9: #{tpu_custom_call.1} parent=5 // pred_check
        _
      $region10: #{tpu_custom_call.1} parent=5 // pred_check_branch
        %116 = sbr.rel (%p113) target = $region12
      $region11: #{tpu_custom_call.1} parent=5 // pred_region
        %s117 = ssub.s32 %s14, 1
        // Predicated region
        $region13: #{tpu_custom_call.1} parent=11 // pred_check
          %p118 = pneg %p75
        $region14: #{tpu_custom_call.1} parent=11 // pred_check_branch
          %120 = sbr.rel (%p118) target = $region16
        $region15: #{tpu_custom_call.1} parent=11 // pred_region
          _
        $region16: #{tpu_custom_call.1} parent=11 // pred_fallthru
          _
      $region12: #{tpu_custom_call.1} parent=5 // pred_fallthru
        _
      %p121 = scmp.lt.s32.totalorder %s14, 2
      // Predicated region
      $region17: #{tpu_custom_call.1} parent=5 // pred_check
        %p122 = pneg %p121
      $region18: #{tpu_custom_call.1} parent=5 // pred_check_branch
        %124 = sbr.rel (%p122) target = $region20
      $region19: #{tpu_custom_call.1} parent=5 // pred_region
        // Predicated region
        $region21: #{tpu_custom_call.1} parent=19 // pred_check
          %p125 = pneg %p48
        $region22: #{tpu_custom_call.1} parent=19 // pred_check_branch
          %127 = sbr.rel (%p125) target = $region24
        $region23: #{tpu_custom_call.1} parent=19 // pred_region
          %s128 = sand.u32 %s38, 1
          %s129 = scalar_lea.sflag [#allocation3], %s128
          %s130 = sand.u32 %s38, 1
          %s131 = smul.addr %s130, 8
          %s132 = scalar_lea.vmem [#allocation2], %s131
          %s133 = smul.u32 2, %s22
          %s135 = ssub.s32 128, 128
          %136 = vsyncadd %s129, %s135
          %s137 = smul.addr %s21, 2
          %s138 = sadd.s32 %s133, %s137
          %s139 = smul.addr %s138, 64
          %s140 = scalar_lea.hbm %s0, %s139
          %s142 = sshll.u32 %s132, 4
          %s143 = int_to_ptr.vmem [resolvable:$true] %s142
          %145 = dma.hbm_to_vmem [thread:$0]  %s140, 128, %s143, %s129
        $region24: #{tpu_custom_call.1} parent=19 // pred_fallthru
          _
      $region20: #{tpu_custom_call.1} parent=5 // pred_fallthru
        _
      %p146 = scmp.le.s32.totalorder 1, %s14
      %p147 = scmp.lt.s32.totalorder %s14, 3
      %p148 = pnand %p146, %p147
      %p149 = pneg %p148
      // Predicated region
      $region25: #{tpu_custom_call.1} parent=5 // pred_check
        _
      $region26: #{tpu_custom_call.1} parent=5 // pred_check_branch
        %151 = sbr.rel (%p148) target = $region28
      $region27: #{tpu_custom_call.1} parent=5 // pred_region
        %s152 = ssub.s32 %s14, 1
        %s153 = sand.u32 %s41, 1
        %s154 = scalar_lea.sflag [#allocation3], %s153
        %s155 = sand.u32 %s41, 1
        %s156 = smul.addr %s155, 8
        %s157 = scalar_lea.vmem [#allocation2], %s156
        // Predicated region
        $region29: #{tpu_custom_call.1} parent=27 // pred_check
          %p158 = pneg %p54
        $region30: #{tpu_custom_call.1} parent=27 // pred_check_branch
          %160 = sbr.rel (%p158) target = $region32
        $region31: #{tpu_custom_call.1} parent=27 // pred_region
          %161 = dma.done %s154, 128
        $region32: #{tpu_custom_call.1} parent=27 // pred_fallthru
          _
        %s162 = sand.u32 %s41, 1
        %s163 = scalar_lea.sflag [#allocation3], %s162
        %s164 = sand.u32 %s41, 1
        %s165 = smul.addr %s164, 8
        %s166 = scalar_lea.vmem [#allocation2], %s165
        %p167 = pneg %p54
        %p168 = pneg %p51
        %p169 = pneg %p75
        %p170 = pneg %p72
        %p171 = pneg %p103
        %p172 = pneg %p100
        %s173 = sand.u32 %s90, 1
        %s174 = scalar_lea.sflag [#allocation4], %s173
        %s175 = sand.u32 %s90, 1
        %s176 = smul.addr %s175, 8
        %s177 = scalar_lea.vmem [#allocation5], %s176
        %s178 = smul.u32 2, %s24
        %s179 = smul.u32 2, %s24
        %v180 = vld [vmem:[%s157] sm:$0xff]
        %v182 = vcombine.high %v180, %v180
        %vm184 = vcmask 1043456
        %v185 = vsel %vm184, %v180, 0.0
        %v186 = vrot.slane %v185, 4
        %v187 = vadd.f32 %v185, %v186
        %v188 = vrot.slane %v187, 2
        %v189 = vadd.f32 %v187, %v188
        %v190 = vrot.slane %v189, 1
        %v191 = vadd.f32 %v189, %v190
        %v192 = vsel %vm184, %v182, 0.0
        %v193 = vrot.slane %v192, 4
        %v194 = vadd.f32 %v192, %v193
        %v195 = vrot.slane %v194, 2
        %v196 = vadd.f32 %v194, %v195
        %v197 = vrot.slane %v196, 1
        %v198 = vadd.f32 %v196, %v197
        %v199 = vrcp.pop 4.0
        %v200 = vmul.f32 %v191, %v199
        %v201 = vmul.f32 %v198, %v199
        %v202 = vadd.f32 %v200, 1e-06
        %v203 = vadd.f32 %v201, 1e-06
        %v204 = vrsqrt.pop %v202
        %v205 = vrsqrt.pop %v203
        %v206 = vld [vmem:[%s1] sm:$0xf]
        %v209 = vcombine.low %v204, %v205
        %v211 = vmul.f32 %v180, %v209
        %213 = vset.pattern.permute.xlu0 0
        %214 = vperm.xlu0 %213, %v206
        %v215 = vpop.permute.xlu0 %214
        %v217 = vunpack.c.l.s4 839922192
        %v218 = vunpack.c.0.s8 %v217
        %v219 = vlaneseq
        %v220 = vshrl.u32 %v219, 7
        %v221 = vsub.s32 %v218, %v220
        %v222 = vrot.slane %v215, %v221
        %v224 = vmul.f32 %v211, %v222
        %225 = vst [vmem:[%s177] sm:$0xff] %v224
        %s226 = sand.u32 %s90, 1
        %s227 = scalar_lea.sflag [#allocation4], %s226
        %s228 = sand.u32 %s90, 1
        %s229 = smul.addr %s228, 8
        %s230 = scalar_lea.vmem [#allocation5], %s229
        // Predicated region
        $region33: #{tpu_custom_call.1} parent=27 // pred_check
          %p231 = pneg %p100
        $region34: #{tpu_custom_call.1} parent=27 // pred_check_branch
          %233 = sbr.rel (%p231) target = $region36
        $region35: #{tpu_custom_call.1} parent=27 // pred_region
          %s234 = smul.u32 2, %s24
          %s236 = ssub.s32 128, 128
          %237 = vsyncadd %s227, %s236
          %s238 = smul.addr %s23, 2
          %s239 = sadd.s32 %s234, %s238
          %s240 = smul.addr %s239, 64
          %s241 = scalar_lea.hbm %s2, %s240
          %s243 = sshll.u32 %s230, 4
          %s244 = int_to_ptr.vmem [resolvable:$true] %s243
          %246 = dma.vmem_to_hbm [thread:$0]  %s244, 128, %s241, %s227
        $region36: #{tpu_custom_call.1} parent=27 // pred_fallthru
          _
      $region28: #{tpu_custom_call.1} parent=5 // pred_fallthru
        _
      %p247 = scmp.le.s32.totalorder 2, %s14
      // Predicated region
      $region37: #{tpu_custom_call.1} parent=5 // pred_check
        %p248 = pneg %p247
      $region38: #{tpu_custom_call.1} parent=5 // pred_check_branch
        %250 = sbr.rel (%p248) target = $region40
      $region39: #{tpu_custom_call.1} parent=5 // pred_region
        %s251 = ssub.s32 %s14, 2
        // Predicated region
        $region41: #{tpu_custom_call.1} parent=39 // pred_check
          %p252 = pneg %p106
        $region42: #{tpu_custom_call.1} parent=39 // pred_check_branch
          %254 = sbr.rel (%p252) target = $region44
        $region43: #{tpu_custom_call.1} parent=39 // pred_region
          %s255 = sand.u32 %s91, 1
          %s256 = scalar_lea.sflag [#allocation4], %s255
          %s257 = sand.u32 %s91, 1
          %s258 = smul.addr %s257, 8
          %s259 = scalar_lea.vmem [#allocation5], %s258
          %260 = dma.done %s256, 128
        $region44: #{tpu_custom_call.1} parent=39 // pred_fallthru
          _
      $region40: #{tpu_custom_call.1} parent=5 // pred_fallthru
        _
    $region6: #{tpu_custom_call.1} parent=1 // loop_footer
      %s18 = sadd.s32 1, %s14
    $region7: #{tpu_custom_call.1} parent=1 // loop_footer_branch
      %13 = sbr.rel target = $region3
    $region8: #{tpu_custom_call.1} parent=1 // loop_exit
      _
    %261 = vsyncpa [#allocation3], 1
    %s262 = scalar_lea.sflag [#allocation3], 1
    %263 = vsyncpa %s262, 1
    %264 = vsyncpa [#allocation4], 1
    %s265 = scalar_lea.sflag [#allocation4], 1
    %266 = vsyncpa %s265, 1

</llo_original>
